<compile_context>
chip_gen: v6e
topology: v6e:2x2x1
jax: 0.10.0
libtpu: 0.0.40
codegen_flags: <defaults>
</compile_context>

<pallas_src>
import functools
import math

import jax
import jax.numpy as jnp
from jax.experimental import pallas as pl
from jax.experimental.pallas import tpu as pltpu


# ----------------------------- in-kernel helpers -----------------------------

def _layernorm(x, gamma, beta, eps):
    """LayerNorm over the last axis; statistics in f32. gamma/beta are (1, E)."""
    mu = jnp.mean(x, axis=-1, keepdims=True)
    var = jnp.mean(jnp.square(x - mu), axis=-1, keepdims=True)
    return (x - mu) * jax.lax.rsqrt(var + eps) * gamma + beta


def _heads_attention(q, k, v, *, n_head, causal):
    """Head-batched scaled-dot-product attention.  q:(L,E), k/v:(S,E) f32 -> (L,E) f32."""
    L, E = q.shape
    S = k.shape[0]
    dh = E // n_head
    bf16 = jnp.bfloat16

    # (L,E)/(S,E) -> (H, L, dh)/(H, S, dh); last (lane) dim stays minor.
    qh = jnp.swapaxes(q.astype(bf16).reshape(L, n_head, dh), 0, 1)
    kh = jnp.swapaxes(k.astype(bf16).reshape(S, n_head, dh), 0, 1)
    vh = jnp.swapaxes(v.astype(bf16).reshape(S, n_head, dh), 0, 1)

    s = jnp.einsum("hld,hsd->hls", qh, kh, preferred_element_type=jnp.float32)
    s = s * (1.0 / math.sqrt(dh))

    if causal:
        rows = jax.lax.broadcasted_iota(jnp.int32, (L, S), 0)
        cols = jax.lax.broadcasted_iota(jnp.int32, (L, S), 1)
        s = jnp.where((cols <= rows)[None, :, :], s, -jnp.inf)

    # softmax in f32; divide replaced by an EUP reciprocal.
    s = s - jnp.max(s, axis=-1, keepdims=True)
    p = jnp.exp(s)
    p = p * pl.reciprocal(jnp.sum(p, axis=-1, keepdims=True), approx=True)

    o = jnp.einsum("hls,hsd->hld", p.astype(bf16), vh, preferred_element_type=jnp.float32)
    return jnp.swapaxes(o, 0, 1).reshape(L, E)           # heads re-concatenated along E


# ---------------------- fused full-stack DecoderLayer kernel -------------------
# grid = (batch, n_layers).  out_ref block is invariant over the layer axis, so it stays
# resident in VMEM and carries the residual stream across layers; hid_ref is only consumed
# at layer 0.  All per-layer parameters are stacked along a leading layer axis.

def decoder_stack_kernel(
        hid_ref, enc_ref,
        ln1_g_ref, ln1_b_ref, w_qkv_ref, b_qkv_ref, w_o1_ref, b_o1_ref,
        ln2_g_ref, ln2_b_ref, w_q2_ref, b_q2_ref, w_kv2_ref, b_kv2_ref, w_o2_ref, b_o2_ref,
        ln3_g_ref, ln3_b_ref, w_ff1_ref, b_ff1_ref, w_ff2_ref, b_ff2_ref,
        out_ref, *, n_head, eps):
    f32, bf16 = jnp.float32, jnp.bfloat16

    @pl.when(pl.program_id(1) == 0)
    def _():                                              # seed the residual carry at layer 0
        out_ref[0] = hid_ref[0]

    x = out_ref[0].astype(f32)                            # (L, E) residual stream in f32
    E = x.shape[-1]

    # ---- block 1: pre-LN causal self-attention (fused QKV, folded out-proj) ----
    xn = _layernorm(x, ln1_g_ref[0], ln1_b_ref[0], eps).astype(bf16)
    qkv = jnp.dot(xn, w_qkv_ref[0], preferred_element_type=f32) + b_qkv_ref[0]
    attn = _heads_attention(qkv[:, :E], qkv[:, E:2 * E], qkv[:, 2 * E:],
                            n_head=n_head, causal=True)
    x = x + jnp.dot(attn.astype(bf16), w_o1_ref[0],
                    preferred_element_type=f32) + b_o1_ref[0]     # dropout = identity (eval)

    # ---- block 2: pre-LN cross-attention over encoder states (fused KV, folded out-proj) ----
    xn = _layernorm(x, ln2_g_ref[0], ln2_b_ref[0], eps).astype(bf16)
    q = jnp.dot(xn, w_q2_ref[0], preferred_element_type=f32) + b_q2_ref[0]
    kv = jnp.dot(enc_ref[0].astype(bf16), w_kv2_ref[0],
                 preferred_element_type=f32) + b_kv2_ref[0]
    attn = _heads_attention(q, kv[:, :E], kv[:, E:], n_head=n_head, causal=False)
    x = x + jnp.dot(attn.astype(bf16), w_o2_ref[0],
                    preferred_element_type=f32) + b_o2_ref[0]

    # ---- block 3: pre-LN feed-forward (Linear -> exact GELU -> Linear) ----
    # NOTE: at realistic E/F the (E,F)/(F,E) weights should be streamed over F via
    # pltpu.emit_pipeline; unnecessary at these test sizes.
    xn = _layernorm(x, ln3_g_ref[0], ln3_b_ref[0], eps).astype(bf16)
    h = jnp.dot(xn, w_ff1_ref[0], preferred_element_type=f32) + b_ff1_ref[0]
    h = jax.nn.gelu(h, approximate=False)
    x = x + jnp.dot(h.astype(bf16), w_ff2_ref[0], preferred_element_type=f32) + b_ff2_ref[0]

    out_ref[0] = x.astype(out_ref.dtype)


def _stack_vmem_limit(hidden, encoder, stacked_params):
    B, L, E = hidden.shape
    S = encoder.shape[1]
    n_layers = stacked_params[0].shape[0]
    act = (2 * L * E + S * E) * 4                                  # hidden in/out + encoder (f32)
    wgt = sum(int(p.size) * p.dtype.itemsize for p in stacked_params) // n_layers
    # double-buffered activations + double-buffered per-layer weights + headroom
    return int(min(64 * 1024 * 1024, max(8 * 1024 * 1024, 4 * act + 2 * wgt + (2 << 20))))


def decoder_stack(hidden, encoder, stacked_params, *, n_head, eps):
    B, L, E = hidden.shape
    S = encoder.shape[1]
    n_layers = stacked_params[0].shape[0]

    in_specs = ([pl.BlockSpec((1, L, E), lambda b, l: (b, 0, 0)),
                 pl.BlockSpec((1, S, E), lambda b, l: (b, 0, 0))]
                + [pl.BlockSpec((1,) + p.shape[1:], lambda b, l: (l, 0, 0))
                   for p in stacked_params])

    return pl.pallas_call(
        functools.partial(decoder_stack_kernel, n_head=n_head, eps=eps),
        out_shape=jax.ShapeDtypeStruct((B, L, E), hidden.dtype),
        grid=(B, n_layers),
        in_specs=in_specs,
        out_specs=pl.BlockSpec((1, L, E), lambda b, l: (b, 0, 0)),
        compiler_params=pltpu.CompilerParams(
            dimension_semantics=("parallel", "arbitrary"),   # batch across TCs, layers sequential
            vmem_limit_bytes=_stack_vmem_limit(hidden, encoder, stacked_params),
        ),
    )(hidden, encoder, *stacked_params)


# --------------------- embedding-norm and LM-head kernels ---------------------

def embed_norm_kernel(tok_ref, pos_ref, g_ref, b_ref, out_ref, *, eps):
    x = tok_ref[...].astype(jnp.float32) + pos_ref[...].astype(jnp.float32)
    out_ref[...] = _layernorm(x, g_ref[...], b_ref[...], eps).astype(out_ref.dtype)


def embed_norm(tok, pos, gamma, beta, *, eps):
    return pl.pallas_call(
        functools.partial(embed_norm_kernel, eps=eps),
        out_shape=jax.ShapeDtypeStruct(tok.shape, jnp.float32),
    )(tok, pos, gamma, beta)


def lm_head_kernel(x_ref, g_ref, b_ref, w_ref, out_ref, *, eps):
    xn = _layernorm(x_ref[...].astype(jnp.float32), g_ref[...], b_ref[...], eps)
    out_ref[...] = jnp.dot(xn.astype(jnp.bfloat16), w_ref[...],
                           preferred_element_type=jnp.float32).astype(out_ref.dtype)


def lm_head(x, gamma, beta, w_out, *, eps):
    N, _ = x.shape
    V = w_out.shape[1]
    return pl.pallas_call(
        functools.partial(lm_head_kernel, eps=eps),
        out_shape=jax.ShapeDtypeStruct((N, V), jnp.float32),
    )(x, gamma, beta, w_out)


# ------------------------- host-side parameter prep ---------------------------

def _row(v):
    return v.reshape(1, -1).astype(jnp.float32)


def _fold_out_proj(out_w, out_b, proj_w, proj_b):
    # (attn @ out_w.T + out_b) @ proj_w.T + proj_b
    #   == attn @ (out_w.T @ proj_w.T) + (proj_w @ out_b + proj_b)
    w = jnp.dot(out_w.T, proj_w.T).astype(jnp.bfloat16)    # (E, E) in (in, out) layout
    b = _row(jnp.dot(proj_w, out_b) + proj_b)
    return w, b


def prepare_layer_params(raw, E):
    a1, a2 = raw["attn1"], raw["attn2"]
    w_o1, b_o1 = _fold_out_proj(a1["out_w"], a1["out_b"], a1["proj_w"], a1["proj_b"])
    w_o2, b_o2 = _fold_out_proj(a2["out_w"], a2["out_b"], a2["proj_w"], a2["proj_b"])
    return (
        _row(raw["ln1_g"]), _row(raw["ln1_b"]),
        a1["in_w"].T.astype(jnp.bfloat16), _row(a1["in_b"]),            # fused QKV (E, 3E)
        w_o1, b_o1,
        _row(raw["ln2_g"]), _row(raw["ln2_b"]),
        a2["in_w"][:E].T.astype(jnp.bfloat16), _row(a2["in_b"][:E]),    # Q         (E, E)
        a2["in_w"][E:].T.astype(jnp.bfloat16), _row(a2["in_b"][E:]),    # fused KV  (E, 2E)
        w_o2, b_o2,
        _row(raw["ln3_g"]), _row(raw["ln3_b"]),
        raw["ffn_w1"].T.astype(jnp.bfloat16), _row(raw["ffn_b1"]),      # (E, F)
        raw["ffn_w2"].T.astype(jnp.bfloat16), _row(raw["ffn_b2"]),      # (F, E)
    )


def prepare_params(raw):
    E = raw["tok_emb"].shape[1]
    per_layer = [prepare_layer_params(l, E) for l in raw["layers"]]
    # Stack every per-layer parameter along a leading layer axis (one pallas_call for the stack).
    stacked = tuple(jnp.stack([lp[i] for lp in per_layer])
                    for i in range(len(per_layer[0])))
    return dict(
        tok_emb=raw["tok_emb"],
        pos_emb=raw["pos_emb"],
        emb_g=_row(raw["emb_ln_g"]), emb_b=_row(raw["emb_ln_b"]),
        layers=stacked,
        fin_g=_row(raw["fin_ln_g"]), fin_b=_row(raw["fin_ln_b"]),
        w_out=raw["out_w"].T.astype(jnp.bfloat16),                      # (E, V), no bias
    )


def make_raw_params(key, cfg):
    """Deterministic synthetic weights in nn.Linear / nn.MultiheadAttention layout."""
    E = cfg["n_embd"]
    F = E * cfg["ffn_ratio"]
    keys = iter(jax.random.split(key, 8 + 16 * cfg["n_decoder_layer"]))

    def w(shape, scale=0.05):
        return (scale * jax.random.normal(next(keys), shape)).astype(jnp.float32)

    def attn():
        return dict(in_w=w((3 * E, E)), in_b=w((3 * E,)),
                    out_w=w((E, E)), out_b=w((E,)),
                    proj_w=w((E, E)), proj_b=w((E,)))

    layers = []
    for _ in range(cfg["n_decoder_layer"]):
        layers.append(dict(
            ln1_g=jnp.ones((E,), jnp.float32), ln1_b=jnp.zeros((E,), jnp.float32),
            attn1=attn(),
            ln2_g=jnp.ones((E,), jnp.float32), ln2_b=jnp.zeros((E,), jnp.float32),
            attn2=attn(),
            ln3_g=jnp.ones((E,), jnp.float32), ln3_b=jnp.zeros((E,), jnp.float32),
            ffn_w1=w((F, E)), ffn_b1=w((F,)),
            ffn_w2=w((E, F)), ffn_b2=w((E,)),
        ))

    tok = w((cfg["n_vocab"], E), scale=0.5).at[cfg["pad_idx"]].set(0.0)  # padding_idx row = 0
    return dict(
        tok_emb=tok,
        pos_emb=w((cfg["max_positions"], E), scale=0.5),
        emb_ln_g=jnp.ones((E,), jnp.float32), emb_ln_b=jnp.zeros((E,), jnp.float32),
        layers=layers,
        fin_ln_g=jnp.ones((E,), jnp.float32), fin_ln_b=jnp.zeros((E,), jnp.float32),
        out_w=w((cfg["n_vocab"], E)),                                    # nn.Linear(E, V, bias=False)
    )


# ------------------------------ full Decoder forward ---------------------------

def decoder_forward(params, input_ids, encoder_hidden_states, *, n_head, eps):
    B, L = input_ids.shape
    E = params["tok_emb"].shape[1]
    V = params["w_out"].shape[1]

    # Embedding: token gather + positional add + LayerNorm (dropout = identity in eval).
    # TODO(synk): the data-dependent token-id gather stays in XLA (jnp.take); a static
    # BlockSpec cannot express a per-token row gather from a realistic-size vocab table.
    tok = jnp.take(params["tok_emb"], input_ids.reshape(-1), axis=0)     # (B*L, E)
    pos = jnp.tile(params["pos_emb"][:L], (B, 1))                        # (B*L, E)
    h = embed_norm(tok, pos, params["emb_g"], params["emb_b"], eps=eps).reshape(B, L, E)

    # Whole decoder stack in one fused pallas_call (residual carried in VMEM across layers).
    h = decoder_stack(h, encoder_hidden_states, params["layers"], n_head=n_head, eps=eps)

    logits = lm_head(h.reshape(B * L, E), params["fin_g"], params["fin_b"],
                     params["w_out"], eps=eps)
    return logits.reshape(B, L, V)


# ----------------------------------- main --------------------------------------

if __name__ == "__main__":
    cfg = dict(n_vocab=64, max_positions=16, n_embd=32, n_head=4, ffn_ratio=4,
               n_decoder_layer=2, pad_idx=0, norm_eps=1e-5)
    B, L, S = 2, 8, 12      # batch, decoder sequence, encoder sequence

    key = jax.random.PRNGKey(0)
    k_ids, k_enc, k_par = jax.random.split(key, 3)
    input_ids = jax.random.randint(k_ids, (B, L), 1, cfg["n_vocab"])
    encoder_hidden_states = jax.random.normal(k_enc, (B, S, cfg["n_embd"]), jnp.float32)

    params = prepare_params(make_raw_params(k_par, cfg))
    logits = decoder_forward(params, input_ids, encoder_hidden_states,
                             n_head=cfg["n_head"], eps=cfg["norm_eps"])
    jax.block_until_ready(logits)

    assert logits.shape == (B, L, cfg["n_vocab"]) and logits.dtype == jnp.float32
    assert bool(jnp.all(jnp.isfinite(logits)))
    print("KERNEL_OK")
</pallas_src>

<mosaic_0001>
module attributes {stable_mosaic.version = 11 : i64} {
  func.func @embed_norm_kernel(%arg0: memref<16x32xf32, #tpu.memory_space<vmem>>, %arg1: memref<16x32xf32, #tpu.memory_space<vmem>>, %arg2: memref<1x32xf32, #tpu.memory_space<vmem>>, %arg3: memref<1x32xf32, #tpu.memory_space<vmem>>, %arg4: memref<16x32xf32, #tpu.memory_space<vmem>>) attributes {dimension_semantics = [], scalar_prefetch = 0 : i64, scratch_operands = 0 : i64, tpu.core_type = #tpu.core_type<tc>} {
    %c0 = arith.constant 0 : index
    %c0_0 = arith.constant 0 : index
    %0 = vector.load %arg0[%c0, %c0_0] : memref<16x32xf32, #tpu.memory_space<vmem>>, vector<16x32xf32>
    %c0_1 = arith.constant 0 : index
    %c0_2 = arith.constant 0 : index
    %1 = vector.load %arg1[%c0_1, %c0_2] : memref<16x32xf32, #tpu.memory_space<vmem>>, vector<16x32xf32>
    %2 = arith.addf %0, %1 : vector<16x32xf32>
    %c0_3 = arith.constant 0 : index
    %c0_4 = arith.constant 0 : index
    %3 = vector.load %arg2[%c0_3, %c0_4] : memref<1x32xf32, #tpu.memory_space<vmem>>, vector<1x32xf32>
    %c0_5 = arith.constant 0 : index
    %c0_6 = arith.constant 0 : index
    %4 = vector.load %arg3[%c0_5, %c0_6] : memref<1x32xf32, #tpu.memory_space<vmem>>, vector<1x32xf32>
    %cst = arith.constant dense<0.000000e+00> : vector<16xf32>
    %5 = vector.multi_reduction <add>, %2, %cst [1] : vector<16x32xf32> to vector<16xf32>
    %6 = vector.shape_cast %5 : vector<16xf32> to vector<16x1xf32>
    %cst_7 = arith.constant 3.200000e+01 : f32
    %7 = vector.broadcast %cst_7 : f32 to vector<16x1xf32>
    %8 = arith.divf %6, %7 : vector<16x1xf32>
    %9 = vector.broadcast %8 : vector<16x1xf32> to vector<16x32xf32>
    %10 = arith.subf %2, %9 : vector<16x32xf32>
    %11 = arith.mulf %10, %10 : vector<16x32xf32>
    %cst_8 = arith.constant dense<0.000000e+00> : vector<16xf32>
    %12 = vector.multi_reduction <add>, %11, %cst_8 [1] : vector<16x32xf32> to vector<16xf32>
    %13 = vector.shape_cast %12 : vector<16xf32> to vector<16x1xf32>
    %cst_9 = arith.constant 3.200000e+01 : f32
    %14 = vector.broadcast %cst_9 : f32 to vector<16x1xf32>
    %15 = arith.divf %13, %14 : vector<16x1xf32>
    %16 = vector.broadcast %8 : vector<16x1xf32> to vector<16x32xf32>
    %17 = arith.subf %2, %16 : vector<16x32xf32>
    %cst_10 = arith.constant 9.99999974E-6 : f32
    %18 = vector.broadcast %cst_10 : f32 to vector<16x1xf32>
    %19 = arith.addf %15, %18 : vector<16x1xf32>
    %20 = math.rsqrt %19 : vector<16x1xf32>
    %21 = vector.broadcast %20 : vector<16x1xf32> to vector<16x32xf32>
    %22 = arith.mulf %17, %21 : vector<16x32xf32>
    %23 = vector.broadcast %3 : vector<1x32xf32> to vector<16x32xf32>
    %24 = arith.mulf %22, %23 : vector<16x32xf32>
    %25 = vector.broadcast %4 : vector<1x32xf32> to vector<16x32xf32>
    %26 = arith.addf %24, %25 : vector<16x32xf32>
    %c0_11 = arith.constant 0 : index
    %c0_12 = arith.constant 0 : index
    %27 = vector.load %arg4[%c0_11, %c0_12] : memref<16x32xf32, #tpu.memory_space<vmem>>, vector<16x32xf32>
    tpu.vector_store %arg4[%c0_11, %c0_12], %26 {strides = array<i32>} : memref<16x32xf32, #tpu.memory_space<vmem>>, vector<16x32xf32>,
    return
  }
}

</mosaic_0001>

<llo_original>
// kernel: tpu_custom_call.1
$region0: #{tpu_custom_call.1}
  #allocation0 [shape = 'u32[]', space=smem, size = 0x4, offset = 0x4, fixed_abs, tag = 'smem constant byte address 0x4 - core index']
  #allocation1 [shape = 'u32[144,128]{1,0:T(1,128)}', space=vmem, size = 0x12000, scoped, tag = 'internal scratch']
  %s0 = inlined_call_operand.hbm [shape: f32[16,32], index: 0, kind: input, shape index: {}]
  %s1 = inlined_call_operand.hbm [shape: f32[16,32], index: 1, kind: input, shape index: {}]
  %s2 = inlined_call_operand.vmem [shape: f32[1,32], index: 2, kind: input, shape index: {}]
  %s3 = inlined_call_operand.vmem [shape: f32[1,32], index: 3, kind: input, shape index: {}]
  %s4 = inlined_call_operand.hbm [shape: f32[16,32], index: 4, kind: output, shape index: {}]
  %s5 = sld [smem:[#allocation0]]
  $region34: #{tpu_custom_call.1} parent=0
    _
  %s7 = ssub.s32 1, %s5
  %s8 = scalar_select 0, %s7, %s5
  $region1: #{tpu_custom_call.1} parent=0
    #allocation2 [shape = 'u8[8192]{0}', space=vmem, size = 0x2000, scoped, tag = 'input window, operand 0, single buffered']
    #allocation3 [shape = 's32[1]{0}', space=sflag, size = 0x4, scoped, tag = 'scoped memory for tpu_custom_call.1']
    #allocation4 [shape = 's32[1]{0}', space=sflag, size = 0x4, scoped, tag = 'scoped memory for tpu_custom_call.1']
    #allocation5 [shape = 'u8[8192]{0}', space=vmem, size = 0x2000, scoped, tag = 'input window, operand 1, single buffered']
    #allocation6 [shape = 's32[1]{0}', space=sflag, size = 0x4, scoped, tag = 'scoped memory for tpu_custom_call.1']
    #allocation7 [shape = 'u8[8192]{0}', space=vmem, size = 0x2000, scoped, tag = 'output window, operand 0, single buffered']
    %9 = vsyncpa [#allocation3], 0
    %10 = vsyncpa [#allocation6], 0
    %11 = vsyncpa [#allocation4], 0
    // Predicated region
    $region2: #{tpu_custom_call.1} parent=1 // pred_check
      _
    $region3: #{tpu_custom_call.1} parent=1 // pred_check_branch
      %13 = sbr.rel (0) target = $region5
    $region4: #{tpu_custom_call.1} parent=1 // pred_region
      %s15 = ssub.s32 256, 256
      %16 = vsyncadd [#allocation3], %s15
      %s17 = sshll.u32 [#allocation2], 4
      %s18 = int_to_ptr.vmem [resolvable:$true] %s17
      %23 = dma.hbm_to_vmem [thread:$0]  %s0, 256, %s18, [#allocation3], 128, 128, 8
    $region5: #{tpu_custom_call.1} parent=1 // pred_fallthru
      _
    // Predicated region
    $region6: #{tpu_custom_call.1} parent=1 // pred_check
      _
    $region7: #{tpu_custom_call.1} parent=1 // pred_check_branch
      %25 = sbr.rel (0) target = $region9
    $region8: #{tpu_custom_call.1} parent=1 // pred_region
      %s27 = ssub.s32 256, 256
      %28 = vsyncadd [#allocation6], %s27
      %s29 = sshll.u32 [#allocation5], 4
      %s30 = int_to_ptr.vmem [resolvable:$true] %s29
      %35 = dma.hbm_to_vmem [thread:$0]  %s1, 256, %s30, [#allocation6], 128, 128, 8
    $region9: #{tpu_custom_call.1} parent=1 // pred_fallthru
      _
    // Predicated region
    $region10: #{tpu_custom_call.1} parent=1 // pred_check
      _
    $region11: #{tpu_custom_call.1} parent=1 // pred_check_branch
      %37 = sbr.rel (0) target = $region13
    $region12: #{tpu_custom_call.1} parent=1 // pred_region
      _
    $region13: #{tpu_custom_call.1} parent=1 // pred_fallthru
      _
    // Predicated region
    $region14: #{tpu_custom_call.1} parent=1 // pred_check
      _
    $region15: #{tpu_custom_call.1} parent=1 // pred_check_branch
      %39 = sbr.rel (0) target = $region17
    $region16: #{tpu_custom_call.1} parent=1 // pred_region
      _
    $region17: #{tpu_custom_call.1} parent=1 // pred_fallthru
      _
    // Predicated region
    $region18: #{tpu_custom_call.1} parent=1 // pred_check
      _
    $region19: #{tpu_custom_call.1} parent=1 // pred_check_branch
      %41 = sbr.rel (0) target = $region21
    $region20: #{tpu_custom_call.1} parent=1 // pred_region
      %42 = dma.done [#allocation3], 256
    $region21: #{tpu_custom_call.1} parent=1 // pred_fallthru
      _
    // Predicated region
    $region22: #{tpu_custom_call.1} parent=1 // pred_check
      _
    $region23: #{tpu_custom_call.1} parent=1 // pred_check_branch
      %44 = sbr.rel (0) target = $region25
    $region24: #{tpu_custom_call.1} parent=1 // pred_region
      %45 = dma.done [#allocation6], 256
    $region25: #{tpu_custom_call.1} parent=1 // pred_fallthru
      _
    %v46 = vld [vmem:[#allocation2] sm:$0xff]
    %v47 = vld [vmem:[#allocation2 + $0x8] sm:$0xff]
    %v48 = vld [vmem:[#allocation5] sm:$0xff]
    %v49 = vld [vmem:[#allocation5 + $0x8] sm:$0xff]
    %v50 = vadd.f32 %v46, %v48
    %v51 = vadd.f32 %v47, %v49
    %v52 = vld [vmem:[%s2] sm:$0x1]
    %v53 = vld [vmem:[%s3] sm:$0x1]
    %vm54 = vcmask 261120
    %v55 = vsel %vm54, %v50, 0.0
    %56 = vadd.xlane.f32.xlu0 %v55
    %v57 = vpop.xlane.xlu0 %56
    %v58 = vsel %vm54, %v51, 0.0
    %59 = vadd.xlane.f32.xlu0 %v58
    %v60 = vpop.xlane.xlu0 %59
    %v61 = vrcp.pop 32.0
    %v62 = vmul.f32 %v57, %v61
    %v63 = vmul.f32 %v60, %v61
    %v64 = vsub.f32 %v50, %v62
    %v65 = vsub.f32 %v51, %v63
    %v66 = vmul.f32 %v64, %v64
    %v67 = vmul.f32 %v65, %v65
    %v68 = vsel %vm54, %v66, 0.0
    %69 = vadd.xlane.f32.xlu0 %v68
    %v70 = vpop.xlane.xlu0 %69
    %v71 = vsel %vm54, %v67, 0.0
    %72 = vadd.xlane.f32.xlu0 %v71
    %v73 = vpop.xlane.xlu0 %72
    %v74 = vmul.f32 %v70, %v61
    %v75 = vmul.f32 %v73, %v61
    %v76 = vadd.f32 %v74, 1e-05
    %v77 = vadd.f32 %v75, 1e-05
    %v78 = vrsqrt.pop %v76
    %v79 = vrsqrt.pop %v77
    %v80 = vmul.f32 %v64, %v78
    %v81 = vmul.f32 %v65, %v79
    %v83 = vlaneseq
    %v84 = vshrl.u32 %v83, 7
    %v85 = vsub.s32 0, %v84
    %v86 = vrot.slane %v52, %v85
    %v88 = vmul.f32 %v80, %v86
    %v89 = vmul.f32 %v81, %v86
    %v91 = vlaneseq
    %v92 = vshrl.u32 %v91, 7
    %v93 = vsub.s32 0, %v92
    %v94 = vrot.slane %v53, %v93
    %v96 = vadd.f32 %v88, %v94
    %v97 = vadd.f32 %v89, %v94
    %98 = vst.msk [vmem:[#allocation7] sm:$0xff] %vm54, %v96
    %99 = vst.msk [vmem:[#allocation7 + $0x8] sm:$0xff] %vm54, %v97
    // Predicated region
    $region26: #{tpu_custom_call.1} parent=1 // pred_check
      _
    $region27: #{tpu_custom_call.1} parent=1 // pred_check_branch
      %101 = sbr.rel (0) target = $region29
    $region28: #{tpu_custom_call.1} parent=1 // pred_region
      %s103 = ssub.s32 256, 256
      %104 = vsyncadd [#allocation4], %s103
      %s105 = sshll.u32 [#allocation7], 4
      %s106 = int_to_ptr.vmem [resolvable:$true] %s105
      %111 = dma.vmem_to_hbm [thread:$0]  %s106, 256, %s4, [#allocation4], 128, 128, 8
    $region29: #{tpu_custom_call.1} parent=1 // pred_fallthru
      _
    // Predicated region
    $region30: #{tpu_custom_call.1} parent=1 // pred_check
      _
    $region31: #{tpu_custom_call.1} parent=1 // pred_check_branch
      %113 = sbr.rel (0) target = $region33
    $region32: #{tpu_custom_call.1} parent=1 // pred_region
      %114 = dma.done [#allocation4], 256
    $region33: #{tpu_custom_call.1} parent=1 // pred_fallthru
      _
    %115 = vsyncpa [#allocation3], 1
    %116 = vsyncpa [#allocation6], 1
    %117 = vsyncpa [#allocation4], 1

</llo_original>
